<compile_context>
chip_gen: v5e
topology: v5e:2x2
jax: 0.10.0
libtpu: 0.0.40
codegen_flags: <defaults>
</compile_context>

<pallas_src>
import math

import jax
import jax.numpy as jnp
from jax.experimental import pallas as pl
from jax.experimental.pallas import tpu as pltpu


# ----------------------------------------------------------------------------
# small helpers
# ----------------------------------------------------------------------------

_VMEM_LIMIT = 32 * 1024 * 1024           # safe on v5e/v6e/v7x scoped defaults


def _round_up(x, m):
    return ((x + m - 1) // m) * m


def _pick_tile(total, cap, align, split_if_over=None):
    """Largest tile <= cap, multiple of `align`, dividing `total`.  If
    `split_if_over` is given and the whole extent fits in one tile but is
    larger than that threshold, split into >=2 tiles (dual-TC on v7x)."""
    t = min(total, cap)
    t = max(align, (t // align) * align)
    while total % t:
        t -= align
    if split_if_over is not None and total > split_if_over and total // t < 2:
        t2 = max(align, ((total // 2) // align) * align)
        while total % t2:
            t2 -= align
        t = t2
    return t


def _pick_batch_block(B, N, H, Dh, budget_bytes=8 << 20):
    """How many batch items (all heads each) per attention grid step."""
    per_item = (N * 3 * H * Dh * 2          # qkv input block (bf16)
                + N * H * Dh * 2            # bf16 output block
                + H * N * Dh * 4            # live f32 per-head outputs
                + 2 * N * N * 4)            # f32 score + prob temporaries
    per_item *= 2                           # double-buffer headroom
    bb = max(1, min(B, budget_bytes // max(per_item, 1)))
    while B % bb:
        bb -= 1
    if bb >= B and B > 1:                   # >=2 grid steps -> both v7x TCs
        bb = max(1, B // 2)
        while B % bb:
            bb -= 1
    return bb


_SQRT_HALF = 0.7071067811865476


def _erf_poly(x):
    # Abramowitz & Stegun 7.1.26; |err| < 1.5e-7.  The divide goes to the EUP
    # via pl.reciprocal(approx=True) so the GELU epilogue stays off the VALU
    # critical path.
    a1, a2, a3, a4, a5 = (0.254829592, -0.284496736, 1.421413741,
                          -1.453152027, 1.061405429)
    p = 0.3275911
    ax = jnp.abs(x)
    t = pl.reciprocal(1.0 + p * ax, approx=True)
    poly = ((((a5 * t + a4) * t + a3) * t + a2) * t + a1) * t
    y = 1.0 - poly * jnp.exp(-ax * ax)
    return jnp.where(x >= 0, y, -y)


def _gelu_exact(x):
    return 0.5 * x * (1.0 + _erf_poly(x * _SQRT_HALF))


def _alibi_slopes(n_heads):
    def pow2(n):
        start = 2.0 ** (-(2.0 ** -(math.log2(n) - 3)))
        return [start * (start ** i) for i in range(n)]

    if math.log2(n_heads).is_integer():
        return pow2(n_heads)
    closest = 2 ** math.floor(math.log2(n_heads))
    return pow2(closest) + _alibi_slopes(2 * closest)[0::2][: n_heads - closest]


def _causal_bias(n):
    """(1,N,N) additive causal mask and (1,N,N) signed distance (j - i)."""
    ii = jnp.arange(n, dtype=jnp.int32)[:, None]
    jj = jnp.arange(n, dtype=jnp.int32)[None, :]
    mask_add = jnp.where(jj <= ii, 0.0, -1e30).astype(jnp.float32)[None]
    neg_dist = (jj - ii).astype(jnp.float32)[None]     # = -(i - j)
    return mask_add, neg_dist


# ----------------------------------------------------------------------------
# one-time parameter preparation (pad to lane-dense N, cast weights to bf16)
# ----------------------------------------------------------------------------

def _prep_linear(w, b):
    K, N = w.shape
    N_pad = _round_up(N, 128)
    wp = jnp.pad(w.astype(jnp.float32), ((0, 0), (0, N_pad - N))).astype(jnp.bfloat16)
    bp = jnp.pad(b.reshape(1, N).astype(jnp.float32), ((0, 0), (0, N_pad - N)))
    return {"w": wp, "b": bp, "n": N}


def _prep_ln(g, b):
    K = g.shape[0]
    return {"g": g.reshape(1, K).astype(jnp.float32),
            "b": b.reshape(1, K).astype(jnp.float32)}


# ----------------------------------------------------------------------------
# fused linear kernel: [LayerNorm] -> matmul + bias -> [GELU] -> [+residual]
# ----------------------------------------------------------------------------

def fused_linear(x, lin, *, ln=None, gelu=False, residual=None,
                 out_dtype=jnp.float32, full_output=False, eps=1e-5):
    """y = [LN](x) @ W + b, optional exact GELU, optional fused residual add.

    x: (M, K) f32 or bf16.  lin holds a pre-padded bf16 weight (K, N_pad),
    pre-padded f32 bias (1, N_pad) and the true output width n.
    Tiled over (M, N); K (<= a few hundred here) stays one full-depth tile so
    the fused LayerNorm sees whole rows.  The normalized, bf16-cast x tile is
    cached in VMEM scratch and reused across all N tiles of a row block.
    """
    w, b, N = lin["w"], lin["b"], lin["n"]
    K, N_pad = w.shape
    M = x.shape[0]
    assert x.shape[1] == K
    has_ln = ln is not None
    has_res = residual is not None

    M_pad = _round_up(M, 8)
    tm = _pick_tile(M_pad, 512, 8, split_if_over=256)
    tn = _pick_tile(N_pad, 1024, 128)

    xp = x if M_pad == M else jnp.pad(x, ((0, M_pad - M), (0, 0)))

    args = [xp]
    in_specs = [pl.BlockSpec((tm, K), lambda i, j: (i, 0))]
    if has_ln:
        args += [ln["g"], ln["b"]]
        in_specs += [pl.BlockSpec((1, K), lambda i, j: (0, 0)),
                     pl.BlockSpec((1, K), lambda i, j: (0, 0))]
    args += [w, b]
    in_specs += [pl.BlockSpec((K, tn), lambda i, j: (0, j)),
                 pl.BlockSpec((1, tn), lambda i, j: (0, j))]
    if has_res:
        res = residual.astype(jnp.float32)
        if res.shape != (M_pad, N_pad):
            res = jnp.pad(res, ((0, M_pad - M), (0, N_pad - N)))
        args.append(res)
        in_specs.append(pl.BlockSpec((tm, tn), lambda i, j: (i, j)))

    def kernel(*refs):
        it = iter(refs)
        x_ref = next(it)
        g_ref = next(it) if has_ln else None
        be_ref = next(it) if has_ln else None
        w_ref = next(it)
        b_ref = next(it)
        r_ref = next(it) if has_res else None
        o_ref = next(it)
        xn_ref = next(it)                                 # (tm, K) bf16 scratch

        @pl.when(pl.program_id(1) == 0)
        def _():
            if has_ln:                                    # f32 statistics
                xv = x_ref[...].astype(jnp.float32)
                mu = jnp.mean(xv, axis=-1, keepdims=True)
                xc = xv - mu
                var = jnp.mean(xc * xc, axis=-1, keepdims=True)
                xv = xc * jax.lax.rsqrt(var + eps) * g_ref[...] + be_ref[...]
                xn_ref[...] = xv.astype(jnp.bfloat16)
            else:
                xn_ref[...] = x_ref[...].astype(jnp.bfloat16)

        acc = jnp.dot(xn_ref[...], w_ref[...],
                      preferred_element_type=jnp.float32)
        acc = acc + b_ref[...]
        if gelu:
            acc = _gelu_exact(acc)
        if has_res:
            acc = acc + r_ref[...]
        o_ref[...] = acc.astype(o_ref.dtype)

    out = pl.pallas_call(
        kernel,
        grid=(M_pad // tm, N_pad // tn),
        in_specs=in_specs,
        out_specs=pl.BlockSpec((tm, tn), lambda i, j: (i, j)),
        out_shape=jax.ShapeDtypeStruct((M_pad, N_pad), out_dtype),
        scratch_shapes=[pltpu.VMEM((tm, K), jnp.bfloat16)],
        compiler_params=pltpu.CompilerParams(
            # j ("arbitrary") must stay on one core so the LN scratch cache
            # is valid; i stays "parallel" for v7x dual-TC sharding.
            dimension_semantics=("parallel", "arbitrary"),
            vmem_limit_bytes=_VMEM_LIMIT),
    )(*args)
    if full_output:
        return out[:M]
    return out[:M, :N]


# ----------------------------------------------------------------------------
# attention kernel: per-batch-block, all heads, lane-dense concatenated output
# ----------------------------------------------------------------------------

def pallas_attention(qkv, heads, dim_head, scale, slopes, mask_add, neg_dist):
    """Causal softmax attention (optional ALiBi).

    qkv      : (B, N, W) bf16, W >= 3*H*Dh, columns [q_h0..q_hH-1,k_*,v_*,pad]
    slopes   : list of H python floats (ALiBi) or None
    mask_add : (1, N, N) f32 additive causal mask (0 / -1e30), DMA'd once
    neg_dist : (1, N, N) f32 (j - i), DMA'd once (only used with slopes)
    Returns (B, N, H*Dh) bf16 with heads concatenated along the last axis.
    """
    B, N, W = qkv.shape
    H, Dh = heads, dim_head
    use_alibi = slopes is not None
    bb = _pick_batch_block(B, N, H, Dh)

    def kernel(*refs):
        it = iter(refs)
        qkv_ref = next(it)
        mask_ref = next(it)
        nd_ref = next(it) if use_alibi else None
        o_ref = next(it)

        mask = mask_ref[0]                                  # (N, N) f32
        nd = nd_ref[0] if use_alibi else None
        outs = []
        for h in range(H):
            q = qkv_ref[:, :, h * Dh:(h + 1) * Dh]          # (bb, N, Dh) bf16
            k = qkv_ref[:, :, (H + h) * Dh:(H + h + 1) * Dh]
            v = qkv_ref[:, :, (2 * H + h) * Dh:(2 * H + h + 1) * Dh]
            s = jax.lax.dot_general(
                q, k, (((2,), (2,)), ((0,), (0,))),
                preferred_element_type=jnp.float32) * scale  # (bb, N, N)
            s = s + mask
            if use_alibi:
                s = s + slopes[h] * nd
            m = jnp.max(s, axis=-1, keepdims=True)
            p = jnp.exp(s - m)
            denom = jnp.sum(p, axis=-1, keepdims=True)
            o = jax.lax.dot_general(
                p.astype(jnp.bfloat16), v, (((2,), (1,)), ((0,), (0,))),
                preferred_element_type=jnp.float32)          # (bb, N, Dh)
            outs.append(o * pl.reciprocal(denom, approx=True))
        o_ref[...] = jnp.concatenate(outs, axis=-1).astype(o_ref.dtype)

    args = [qkv, mask_add]
    in_specs = [pl.BlockSpec((bb, N, W), lambda i: (i, 0, 0)),
                pl.BlockSpec((1, N, N), lambda i: (0, 0, 0))]
    if use_alibi:
        args.append(neg_dist)
        in_specs.append(pl.BlockSpec((1, N, N), lambda i: (0, 0, 0)))

    return pl.pallas_call(
        kernel,
        grid=(B // bb,),
        in_specs=in_specs,
        out_specs=pl.BlockSpec((bb, N, H * Dh), lambda i: (i, 0, 0)),
        out_shape=jax.ShapeDtypeStruct((B, N, H * Dh), jnp.bfloat16),
        compiler_params=pltpu.CompilerParams(
            dimension_semantics=("parallel",),
            vmem_limit_bytes=_VMEM_LIMIT),
    )(*args)


# ----------------------------------------------------------------------------
# model glue (reshapes, concats, parameter plumbing)
# ----------------------------------------------------------------------------

def multihead_attention(x, p, heads, dim_head, mask_add, neg_dist, slopes):
    B, N, D = x.shape
    xf = x.reshape(B * N, D)
    # fused LayerNorm prenorm + QKV projection, emitted in bf16, head-blocked
    # column layout -> feeds attention directly (no transpose, no extra cast).
    qkv = fused_linear(xf, p["qkv"], ln=p["ln"], out_dtype=jnp.bfloat16,
                       full_output=True)
    qkv = qkv.reshape(B, N, qkv.shape[-1])
    o = pallas_attention(qkv, heads, dim_head, dim_head ** -0.5,
                         slopes, mask_add, neg_dist)          # (B, N, H*Dh)
    # fused output projection + residual add (residual kept in f32)
    out = fused_linear(o.reshape(B * N, heads * dim_head), p["out"],
                       residual=xf)
    return out.reshape(B, N, D)


def feed_forward(x, p):
    B, N, D = x.shape
    xf = x.reshape(B * N, D)
    # fused LayerNorm + Linear + exact GELU (bf16 hidden), then Linear + residual
    h = fused_linear(xf, p["fc1"], ln=p["ln"], gelu=True, out_dtype=jnp.bfloat16)
    out = fused_linear(h, p["fc2"], residual=xf)
    return out.reshape(B, N, D)


def transformer(x, blocks, heads, dim_head, mask_add, neg_dist, slopes):
    for blk in blocks:
        x = multihead_attention(x, blk["attn"], heads, dim_head,
                                mask_add, neg_dist, slopes)
        x = feed_forward(x, blk["ff"])
    return x


def rq_transformer_forward(codes, params, cfg):
    B, T, R = codes.shape
    heads, dim_head = cfg["heads"], cfg["dim_head"]
    inner = cfg["inner_dim"]
    dim = cfg["code_dim"]
    C = cfg["codebook_size"]

    # --- residual quantizer embed (eval mode): per-layer codebook lookup ---
    # TODO(synk): codebook gather + cumsum stay as plain-JAX glue (irregular
    # gather, no clean Pallas equivalent at these shapes).
    cb = params["codebooks"]                                     # (R, C, dim)
    per = jnp.stack([cb[q][codes[..., q]] for q in range(R)], axis=2)  # (B,T,R,dim)
    quantized = per.sum(axis=2)                                  # (B,T,dim)
    partials = jnp.cumsum(per, axis=2)[:, :, :-1, :]             # (B,T,R-1,dim)

    # --- time transformer path (causal + ALiBi) ---
    qz = fused_linear(quantized.reshape(B * T, dim),
                      params["time_proj"]).reshape(B, T, inner)
    start = jnp.broadcast_to(params["time_start_token"], (B, 1, inner))
    time_tokens = jnp.concatenate([start, qz[:, :-1, :]], axis=1)      # (B,T,inner)
    t_mask, t_nd = _causal_bias(T)
    slopes = _alibi_slopes(heads)                                      # python floats
    time_tokens = transformer(time_tokens, params["time_blocks"],
                              heads, dim_head, t_mask, t_nd, slopes)
    time_tokens = time_tokens[:, :, None, :]                     # (B,T,1,inner)

    # --- resolution transformer path (causal, no ALiBi) ---
    res_pos = params["res_pos_emb"][:R]                          # (R, inner)
    res_proj = fused_linear(partials.reshape(B * T * (R - 1), dim),
                            params["res_proj"])
    res_proj = res_proj.reshape(B, T, R - 1, inner)
    res_tokens = jnp.concatenate([time_tokens, res_proj], axis=2)      # (B,T,R,inner)
    res_tokens = (res_tokens + res_pos).reshape(B * T, R, inner)
    r_mask, r_nd = _causal_bias(R)
    res_tokens = transformer(res_tokens, params["res_blocks"],
                             heads, dim_head, r_mask, r_nd, None)
    res_tokens = res_tokens.reshape(B, T, R, inner)

    # --- to_logits: fused LayerNorm + Linear ---
    flat = res_tokens.reshape(B * T * R, inner)
    logits = fused_linear(flat, params["logits"], ln=params["logits_ln"])
    return logits.reshape(B, T, R, C)


# ----------------------------------------------------------------------------
# deterministic parameter construction (prepped once: padded + bf16 weights)
# ----------------------------------------------------------------------------

def make_params(key, cfg):
    inner = cfg["inner_dim"]
    dim = cfg["code_dim"]
    heads, dim_head = cfg["heads"], cfg["dim_head"]
    mult = cfg["ff_mult"]
    C = cfg["codebook_size"]
    R = cfg["num_quantizers"]
    hd = heads * dim_head

    keys = iter(jax.random.split(key, 256))

    def nrm(shape, scale=0.02):
        return scale * jax.random.normal(next(keys), shape, dtype=jnp.float32)

    def lin(k_in, n_out):
        return _prep_linear(nrm((k_in, n_out)), jnp.zeros((n_out,), jnp.float32))

    def ln(d):
        return _prep_ln(jnp.ones((d,), jnp.float32), jnp.zeros((d,), jnp.float32))

    def block_params():
        return {
            "attn": {"ln": ln(inner), "qkv": lin(inner, 3 * hd),
                     "out": lin(hd, inner)},
            "ff": {"ln": ln(inner), "fc1": lin(inner, inner * mult),
                   "fc2": lin(inner * mult, inner)},
        }

    params = {
        "codebooks": nrm((R, C, dim), scale=1.0),
        "time_start_token": nrm((inner,), scale=1.0),
        "time_proj": lin(dim, inner),
        "res_pos_emb": nrm((R, inner), scale=1.0),
        "res_proj": lin(dim, inner),
        "time_blocks": [block_params() for _ in range(cfg["time_layers"])],
        "res_blocks": [block_params() for _ in range(cfg["resolution_layers"])],
        "logits_ln": ln(inner),
        "logits": lin(inner, C),
    }
    return params


# ----------------------------------------------------------------------------
# main
# ----------------------------------------------------------------------------

if __name__ == "__main__":
    cfg = dict(
        inner_dim=32,
        code_dim=16,
        codebook_size=64,
        num_quantizers=4,
        heads=4,
        dim_head=8,
        ff_mult=4,
        time_layers=1,
        resolution_layers=1,
    )

    key = jax.random.PRNGKey(0)
    pkey, ckey = jax.random.split(key)
    params = make_params(pkey, cfg)

    B, T, R = 2, 8, 4
    codes = jax.random.randint(ckey, (B, T, R), 0, cfg["codebook_size"],
                               dtype=jnp.int32)

    logits = rq_transformer_forward(codes, params, cfg)
    logits = jax.block_until_ready(logits)

    assert logits.shape == (B, T, R, cfg["codebook_size"])
    assert logits.dtype == jnp.float32
    assert bool(jnp.all(jnp.isfinite(logits)))
    print("KERNEL_OK")
</pallas_src>

<mosaic_0001>
module attributes {stable_mosaic.version = 11 : i64} {
  func.func @kernel(%arg0: i32, %arg1: i32, %arg2: memref<16x16xf32, #tpu.memory_space<vmem>>, %arg3: memref<16x128xbf16, #tpu.memory_space<vmem>>, %arg4: memref<1x128xf32, #tpu.memory_space<vmem>>, %arg5: memref<16x128xf32, #tpu.memory_space<vmem>>, %arg6: memref<16x16xbf16, #tpu.memory_space<vmem>>) attributes {dimension_semantics = [#tpu.dimension_semantics<parallel>, #tpu.dimension_semantics<arbitrary>], iteration_bounds = array<i64: 1, 1>, scalar_prefetch = 0 : i64, scratch_operands = 1 : i64, tpu.core_type = #tpu.core_type<tc>, window_params = [{transform_indices = @transform_0, window_bounds = array<i64: 16, 16>}, {transform_indices = @transform_1, window_bounds = array<i64: 16, 128>}, {transform_indices = @transform_2, window_bounds = array<i64: 1, 128>}, {transform_indices = @transform_3, window_bounds = array<i64: 16, 128>}]} {
    %c0_i32 = arith.constant 0 : i32
    %0 = arith.cmpi eq, %arg1, %c0_i32 : i32
    %1 = arith.extui %0 : i1 to i32
    %c0_i32_0 = arith.constant 0 : i32
    %2 = arith.cmpi ne, %1, %c0_i32_0 : i32
    scf.if %2 {
      %c0_8 = arith.constant 0 : index
      %c0_9 = arith.constant 0 : index
      %10 = vector.load %arg2[%c0_8, %c0_9] : memref<16x16xf32, #tpu.memory_space<vmem>>, vector<16x16xf32>
      %11 = arith.truncf %10 : vector<16x16xf32> to vector<16x16xbf16>
      %c0_10 = arith.constant 0 : index
      %c0_11 = arith.constant 0 : index
      %12 = vector.load %arg6[%c0_10, %c0_11] : memref<16x16xbf16, #tpu.memory_space<vmem>>, vector<16x16xbf16>
      tpu.vector_store %arg6[%c0_10, %c0_11], %11 {strides = array<i32>} : memref<16x16xbf16, #tpu.memory_space<vmem>>, vector<16x16xbf16>,
    } else {
    }
    %c0 = arith.constant 0 : index
    %c0_1 = arith.constant 0 : index
    %3 = vector.load %arg6[%c0, %c0_1] : memref<16x16xbf16, #tpu.memory_space<vmem>>, vector<16x16xbf16>
    %c0_2 = arith.constant 0 : index
    %c0_3 = arith.constant 0 : index
    %4 = vector.load %arg3[%c0_2, %c0_3] : memref<16x128xbf16, #tpu.memory_space<vmem>>, vector<16x128xbf16>
    %cst = arith.constant dense<0.000000e+00> : vector<16x128xf32>
    %5 = tpu.matmul %3, %4, %cst {dimension_numbers = #tpu.dot_dimension_numbers<[1], [0], [0], [1], [0, 0, 1, 1], [], []>} : vector<16x16xbf16>, vector<16x128xbf16>, vector<16x128xf32> -> vector<16x128xf32>
    %c0_4 = arith.constant 0 : index
    %c0_5 = arith.constant 0 : index
    %6 = vector.load %arg4[%c0_4, %c0_5] : memref<1x128xf32, #tpu.memory_space<vmem>>, vector<1x128xf32>
    %7 = vector.broadcast %6 : vector<1x128xf32> to vector<16x128xf32>
    %8 = arith.addf %5, %7 : vector<16x128xf32>
    %c0_6 = arith.constant 0 : index
    %c0_7 = arith.constant 0 : index
    %9 = vector.load %arg5[%c0_6, %c0_7] : memref<16x128xf32, #tpu.memory_space<vmem>>, vector<16x128xf32>
    tpu.vector_store %arg5[%c0_6, %c0_7], %8 {strides = array<i32>} : memref<16x128xf32, #tpu.memory_space<vmem>>, vector<16x128xf32>,
    return
  }
  func.func @transform_0(%arg0: i32, %arg1: i32) -> (i32, i32) {
    %c0_i32 = arith.constant 0 : i32
    %c0_i32_0 = arith.constant 0 : i32
    return %arg0, %c0_i32 : i32, i32
  }
  func.func @transform_1(%arg0: i32, %arg1: i32) -> (i32, i32) {
    %c0_i32 = arith.constant 0 : i32
    %c0_i32_0 = arith.constant 0 : i32
    return %c0_i32, %arg1 : i32, i32
  }
  func.func @transform_2(%arg0: i32, %arg1: i32) -> (i32, i32) {
    %c0_i32 = arith.constant 0 : i32
    %c0_i32_0 = arith.constant 0 : i32
    return %c0_i32, %arg1 : i32, i32
  }
  func.func @transform_3(%arg0: i32, %arg1: i32) -> (i32, i32) {
    %c0_i32 = arith.constant 0 : i32
    return %arg0, %arg1 : i32, i32
  }
}

</mosaic_0001>

<llo_original>
// kernel: tpu_custom_call.1
$region0: #{tpu_custom_call.1}
  #allocation0 [shape = 'u32[]', space=smem, size = 0x4, offset = 0x4, fixed_abs, tag = 'smem constant byte address 0x4 - core index']
  #allocation1 [shape = 'u32[72,128]{1,0:T(1,128)}', space=vmem, size = 0x9000, scoped, tag = 'internal scratch']
  #allocation2 [shape = 'bf16[16,16]{1,0:T(8,128)(2,1)}', space=vmem, size = 0x1000, scoped, tag = 'scratch operand']
  %s0 = inlined_call_operand.hbm [shape: f32[16,16], index: 0, kind: input, shape index: {}]
  %s1 = inlined_call_operand.hbm [shape: bf16[16,128], index: 1, kind: input, shape index: {}]
  %s2 = inlined_call_operand.vmem [shape: f32[1,128], index: 2, kind: input, shape index: {}]
  %s3 = inlined_call_operand.hbm [shape: f32[16,128], index: 3, kind: output, shape index: {}]
  %s4 = sld [smem:[#allocation0]]
  $region34: #{tpu_custom_call.1} parent=0
    _
  %s6 = ssub.s32 1, %s4
  %s7 = scalar_select 0, %s6, %s4
  $region1: #{tpu_custom_call.1} parent=0
    #allocation3 [shape = 'u8[8192]{0}', space=vmem, size = 0x2000, scoped, tag = 'input window, operand 0, single buffered']
    #allocation4 [shape = 's32[1]{0}', space=sflag, size = 0x4, scoped, tag = 'scoped memory for tpu_custom_call.1']
    #allocation5 [shape = 's32[1]{0}', space=sflag, size = 0x4, scoped, tag = 'scoped memory for tpu_custom_call.1']
    #allocation6 [shape = 'u8[4096]{0}', space=vmem, size = 0x1000, scoped, tag = 'input window, operand 1, single buffered']
    #allocation7 [shape = 's32[1]{0}', space=sflag, size = 0x4, scoped, tag = 'scoped memory for tpu_custom_call.1']
    #allocation8 [shape = 'u8[8192]{0}', space=vmem, size = 0x2000, scoped, tag = 'output window, operand 0, single buffered']
    %8 = vsyncpa [#allocation4], 0
    %9 = vsyncpa [#allocation7], 0
    %10 = vsyncpa [#allocation5], 0
    // Predicated region
    $region2: #{tpu_custom_call.1} parent=1 // pred_check
      _
    $region3: #{tpu_custom_call.1} parent=1 // pred_check_branch
      %12 = sbr.rel (0) target = $region5
    $region4: #{tpu_custom_call.1} parent=1 // pred_region
      %14 = vsyncadd [#allocation4], 0
      %s15 = sshll.u32 %s0, 4
      %s16 = int_to_ptr.hbm [resolvable:$true] %s15
      %s17 = sshll.u32 [#allocation3], 4
      %s18 = int_to_ptr.vmem [resolvable:$true] %s17
      %23 = dma.hbm_to_vmem [thread:$0]  %s16, 256, %s18, [#allocation4], 128, 128, 8
    $region5: #{tpu_custom_call.1} parent=1 // pred_fallthru
      _
    // Predicated region
    $region6: #{tpu_custom_call.1} parent=1 // pred_check
      _
    $region7: #{tpu_custom_call.1} parent=1 // pred_check_branch
      %25 = sbr.rel (0) target = $region9
    $region8: #{tpu_custom_call.1} parent=1 // pred_region
      %27 = vsyncadd [#allocation7], 0
      %s28 = sshll.u32 %s1, 4
      %s29 = int_to_ptr.hbm [resolvable:$true] %s28
      %s30 = sshll.u32 [#allocation6], 4
      %s31 = int_to_ptr.vmem [resolvable:$true] %s30
      %36 = dma.hbm_to_vmem [thread:$0]  %s29, 128, %s31, [#allocation7], 64, 64, 4
    $region9: #{tpu_custom_call.1} parent=1 // pred_fallthru
      _
    // Predicated region
    $region10: #{tpu_custom_call.1} parent=1 // pred_check
      _
    $region11: #{tpu_custom_call.1} parent=1 // pred_check_branch
      %38 = sbr.rel (0) target = $region13
    $region12: #{tpu_custom_call.1} parent=1 // pred_region
      _
    $region13: #{tpu_custom_call.1} parent=1 // pred_fallthru
      _
    // Predicated region
    $region14: #{tpu_custom_call.1} parent=1 // pred_check
      _
    $region15: #{tpu_custom_call.1} parent=1 // pred_check_branch
      %40 = sbr.rel (0) target = $region17
    $region16: #{tpu_custom_call.1} parent=1 // pred_region
      %42 = dma.done [#allocation4], 256
    $region17: #{tpu_custom_call.1} parent=1 // pred_fallthru
      _
    // Predicated region
    $region18: #{tpu_custom_call.1} parent=1 // pred_check
      _
    $region19: #{tpu_custom_call.1} parent=1 // pred_check_branch
      %44 = sbr.rel (0) target = $region21
    $region20: #{tpu_custom_call.1} parent=1 // pred_region
      %46 = dma.done [#allocation7], 128
    $region21: #{tpu_custom_call.1} parent=1 // pred_fallthru
      _
    %p48 = scmp.eq.s32.totalorder 0, 0
    // Predicated region
    $region22: #{tpu_custom_call.1} parent=1 // pred_check
      %p49 = pneg %p48
    $region23: #{tpu_custom_call.1} parent=1 // pred_check_branch
      %51 = sbr.rel (%p49) target = $region25
    $region24: #{tpu_custom_call.1} parent=1 // pred_region
      %v52 = vld [vmem:[#allocation3] sm:$0xff]
      %v53 = vld [vmem:[#allocation3 + $0x8] sm:$0xff]
      %v54 = vpack.c.bf16 %v52, %v52
      %v55 = vpack.c.bf16 %v53, %v53
      %vm56 = vcmask 125952
      %57 = vst.msk [vmem:[#allocation2] sm:$0xf] %vm56, %v54
      %58 = vst.msk [vmem:[#allocation2 + $0x4] sm:$0xf] %vm56, %v55
    $region25: #{tpu_custom_call.1} parent=1 // pred_fallthru
      _
    %v59 = vld [vmem:[#allocation2] sm:$0xf]
    %v60 = vld [vmem:[#allocation2 + $0x4] sm:$0xf]
    %v61 = vld [vmem:[#allocation6] sm:$0xf]
    %v62 = vld [vmem:[#allocation6 + $0x4] sm:$0xf]
    %v63 = vld [vmem:[%s2] sm:$0x1]
    %v65 = vperm.slane %v63, 0
    %v69 = vunpack.c.l.b16 %v59
    %v70 = vunpack.c.l.b16 %v60
    %v71 = vpack.c.b16 %v70, %v69
    %v74 = vunpack.c.l.b16 %v61
    %v75 = vunpack.c.l.b16 %v62
    %v76 = vpack.c.b16 %v75, %v74
    %vm78 = vcmask 130048
    %v80 = vsel %vm78, %v71, 0
    %82 = vmatpush.bf16.msra.mxu0 0
    %83 = vmatpush.bf16.msra.mxu0 0
    %84 = vmatpush.bf16.msra.mxu0 0
    %85 = vmatpush.bf16.msra.mxu0 0
    %86 = vmatpush.bf16.msra.mxu0 0
    %87 = vmatpush.bf16.msra.mxu0 0
    %88 = vmatpush.bf16.msra.mxu0 0
    %89 = vmatpush.bf16.msra.mxu0 %v76
    %90 = vmatmul.bf16.gmra.mxu0 %v80
    %v91 = vpop.f32.mrf.mxu0
    %v92 = vadd.f32 %v65, %v91
    %v93 = vpop.f32.mrf.mxu0
    %v94 = vadd.f32 %v65, %v93
    %95 = vdwg.mxu0
    %96 = vst [vmem:[#allocation8] sm:$0xff] %v92
    %97 = vst [vmem:[#allocation8 + $0x8] sm:$0xff] %v94
    // Predicated region
    $region26: #{tpu_custom_call.1} parent=1 // pred_check
      _
    $region27: #{tpu_custom_call.1} parent=1 // pred_check_branch
      %99 = sbr.rel (0) target = $region29
    $region28: #{tpu_custom_call.1} parent=1 // pred_region
      %101 = vsyncadd [#allocation5], 0
      %s102 = sshll.u32 [#allocation8], 4
      %s103 = int_to_ptr.vmem [resolvable:$true] %s102
      %s104 = sshll.u32 %s3, 4
      %s105 = int_to_ptr.hbm [resolvable:$true] %s104
      %110 = dma.vmem_to_hbm [thread:$0]  %s103, 256, %s105, [#allocation5], 128, 128, 8
    $region29: #{tpu_custom_call.1} parent=1 // pred_fallthru
      _
    // Predicated region
    $region30: #{tpu_custom_call.1} parent=1 // pred_check
      _
    $region31: #{tpu_custom_call.1} parent=1 // pred_check_branch
      %112 = sbr.rel (0) target = $region33
    $region32: #{tpu_custom_call.1} parent=1 // pred_region
      %114 = dma.done [#allocation5], 256
    $region33: #{tpu_custom_call.1} parent=1 // pred_fallthru
      _
    %115 = vsyncpa [#allocation4], 1
    %116 = vsyncpa [#allocation7], 1
    %117 = vsyncpa [#allocation5], 1

</llo_original>
